<compile_context>
chip_gen: v5e
topology: v5e:2x2
jax: 0.10.0
libtpu: 0.0.40
codegen_flags: <defaults>
</compile_context>

<pallas_src>
import functools

import jax
import jax.numpy as jnp
from jax.experimental import pallas as pl
from jax.experimental.pallas import tpu as pltpu

D_IN, H1, H2, D_OUT = 28 * 28, 128, 64, 10
PAD = 128          # lane-dense width used for layers 2/3 and the output slab
NEG = -1e30        # softmax mask value for the padded logit lanes
TB_CAP = 1024      # batch-tile cap: fits v5e's 16 MiB scoped-VMEM default


def _round_up(n, m):
    return ((n + m - 1) // m) * m


def _choose_tile(b_pad, tile_cap):
    """Batch tile (multiple of 8) targeting >=4 grid steps, even when possible."""
    tile_cap = max(8, _round_up(tile_cap, 8))
    max_tiles = max(1, b_pad // 8)               # can't tile finer than 8 rows
    n = pl.cdiv(b_pad, tile_cap)                 # steps forced by the cap
    n = min(max(n, 4), max_tiles)                # >=4 steps for pipelining
    if n % 2 == 1 and n + 1 <= max_tiles:        # even grid -> v7x megacore balance
        n += 1
    tb = min(_round_up(pl.cdiv(b_pad, n), 8), tile_cap)
    assert tb % 8 == 0
    return tb


def mnist_mlp_kernel(x_ref, w1_ref, w2_ref, w3_ref, b_ref, out_ref):
    """One (TB, 784) f32 batch tile -> (TB, 128) lane-dense softmax tile."""
    x = x_ref[...].astype(jnp.bfloat16)              # f32 DMA, in-kernel cast
    b1 = b_ref[0:1, :]                               # (1, 128) f32
    b2 = b_ref[1:2, :]                               # pad lanes = 0
    b3 = b_ref[2:3, :]                               # pad lanes = -1e30

    # ---- Linear(784 -> 128) + ReLU --------------------------------------
    h1 = jnp.dot(x, w1_ref[...], preferred_element_type=jnp.float32) + b1
    h1 = jnp.maximum(h1, 0.0).astype(jnp.bfloat16)

    # ---- Linear(128 -> 64, zero-padded to 128 lanes) + ReLU --------------
    h2 = jnp.dot(h1, w2_ref[...], preferred_element_type=jnp.float32) + b2
    h2 = jnp.maximum(h2, 0.0).astype(jnp.bfloat16)   # pad lanes stay exactly 0

    # ---- Linear(64 -> 10, zero-padded to 128 lanes) ----------------------
    logits = jnp.dot(h2, w3_ref[...], preferred_element_type=jnp.float32) + b3

    # ---- Softmax over 128 padded lanes (pad lanes are -1e30 -> exp == 0) --
    m = jnp.max(logits, axis=-1, keepdims=True)
    e = jnp.exp(logits - m)
    s = jnp.sum(e, axis=-1, keepdims=True)
    r = pl.reciprocal(s, approx=True)                # EUP vrcp (free slot)
    r = r * (2.0 - s * r)                            # one Newton refinement
    out_ref[...] = e * r


def prepare_params(params):
    """Pad / cast natural-layout params into the kernel's resident layout."""
    w1 = params["w1"].astype(jnp.bfloat16)                             # (784, 128)
    w2 = jnp.zeros((H1, PAD), jnp.float32).at[:, :H2].set(params["w2"])
    w3 = jnp.zeros((PAD, PAD), jnp.float32).at[:H2, :D_OUT].set(params["w3"])
    b = jnp.zeros((3, PAD), jnp.float32)
    b = b.at[0, :].set(params["b1"][0])
    b = b.at[1, :H2].set(params["b2"][0])
    b = b.at[2, :].set(NEG)
    b = b.at[2, :D_OUT].set(params["b3"][0])
    return dict(w1=w1, w2=w2.astype(jnp.bfloat16),
                w3=w3.astype(jnp.bfloat16), b=b)


@functools.partial(jax.jit, static_argnames=("tile_b",))
def mnist_mlp(x, kparams, tile_b=TB_CAP):
    """x: (B, 784) float32.  kparams: output of prepare_params()."""
    B = x.shape[0]
    B_pad = _round_up(B, 8)                    # sublane rule only (<= 7 rows)
    if B_pad != B:
        x = jnp.pad(x, ((0, B_pad - B), (0, 0)))

    TB = _choose_tile(B_pad, tile_b)
    grid = pl.cdiv(B_pad, TB)                  # partial last block if needed

    out = pl.pallas_call(
        mnist_mlp_kernel,
        out_shape=jax.ShapeDtypeStruct((B_pad, PAD), jnp.float32),
        grid=(grid,),
        in_specs=[
            pl.BlockSpec((TB, D_IN), lambda i: (i, 0)),   # x (f32): tiled on batch
            pl.BlockSpec((D_IN, H1), lambda i: (0, 0)),   # W1: VMEM-resident
            pl.BlockSpec((H1, PAD), lambda i: (0, 0)),    # W2 (padded): resident
            pl.BlockSpec((PAD, PAD), lambda i: (0, 0)),   # W3 (padded): resident
            pl.BlockSpec((3, PAD), lambda i: (0, 0)),     # packed biases
        ],
        out_specs=pl.BlockSpec((TB, PAD), lambda i: (i, 0)),
        compiler_params=pltpu.CompilerParams(
            dimension_semantics=("parallel",)),
    )(x, kparams["w1"], kparams["w2"], kparams["w3"], kparams["b"])

    return out[:B, :D_OUT]


def init_params(key):
    """Deterministic init mimicking nn.Linear default U[-1/sqrt(in), 1/sqrt(in)].

    Weights stored transposed vs. PyTorch -> (in, out); biases (1, out).
    """
    dims = [(D_IN, H1), (H1, H2), (H2, D_OUT)]
    params = {}
    for i, (fan_in, fan_out) in enumerate(dims, start=1):
        key, kw, kb = jax.random.split(key, 3)
        bound = 1.0 / jnp.sqrt(float(fan_in))
        params[f"w{i}"] = jax.random.uniform(
            kw, (fan_in, fan_out), jnp.float32, -bound, bound)
        params[f"b{i}"] = jax.random.uniform(
            kb, (1, fan_out), jnp.float32, -bound, bound)
    return params


def reference(x, p):
    """Pure-JAX reference mirroring the kernel's bf16 matmul / f32 accumulate."""
    cast = lambda a: a.astype(jnp.bfloat16)
    h1 = jnp.maximum(
        jnp.dot(cast(x), cast(p["w1"]), preferred_element_type=jnp.float32)
        + p["b1"], 0.0)
    h2 = jnp.maximum(
        jnp.dot(cast(h1), cast(p["w2"]), preferred_element_type=jnp.float32)
        + p["b2"], 0.0)
    logits = (jnp.dot(cast(h2), cast(p["w3"]),
                      preferred_element_type=jnp.float32) + p["b3"])
    return jax.nn.softmax(logits, axis=-1)


if __name__ == "__main__":
    key = jax.random.PRNGKey(0)
    kx, kp = jax.random.split(key)
    B = 8
    x = jax.random.normal(kx, (B, D_IN), jnp.float32)
    params = init_params(kp)
    kparams = prepare_params(params)

    out = jax.block_until_ready(mnist_mlp(x, kparams))

    ref = reference(x, params)
    assert out.shape == (B, D_OUT)
    assert jnp.allclose(jnp.sum(out, axis=-1), 1.0, atol=1e-4)
    assert jnp.allclose(out, ref, atol=1e-4, rtol=1e-3)

    print("KERNEL_OK")
</pallas_src>

<mosaic_0001>
module attributes {stable_mosaic.version = 11 : i64} {
  func.func @mnist_mlp_kernel(%arg0: i32, %arg1: memref<8x784xf32, #tpu.memory_space<vmem>>, %arg2: memref<784x128xbf16, #tpu.memory_space<vmem>>, %arg3: memref<128x128xbf16, #tpu.memory_space<vmem>>, %arg4: memref<128x128xbf16, #tpu.memory_space<vmem>>, %arg5: memref<3x128xf32, #tpu.memory_space<vmem>>, %arg6: memref<8x128xf32, #tpu.memory_space<vmem>>) attributes {dimension_semantics = [#tpu.dimension_semantics<parallel>], iteration_bounds = array<i64: 1>, scalar_prefetch = 0 : i64, scratch_operands = 0 : i64, tpu.core_type = #tpu.core_type<tc>, window_params = [{transform_indices = @transform_0, window_bounds = array<i64: 8, 784>}, {pipeline_mode = #tpu.pipeline_mode<synchronous>, transform_indices = @transform_1, window_bounds = array<i64: 784, 128>}, {pipeline_mode = #tpu.pipeline_mode<synchronous>, transform_indices = @transform_2, window_bounds = array<i64: 128, 128>}, {pipeline_mode = #tpu.pipeline_mode<synchronous>, transform_indices = @transform_3, window_bounds = array<i64: 128, 128>}, {pipeline_mode = #tpu.pipeline_mode<synchronous>, transform_indices = @transform_4, window_bounds = array<i64: 3, 128>}, {transform_indices = @transform_5, window_bounds = array<i64: 8, 128>}]} {
    %c0 = arith.constant 0 : index
    %c0_0 = arith.constant 0 : index
    %0 = vector.load %arg1[%c0, %c0_0] : memref<8x784xf32, #tpu.memory_space<vmem>>, vector<8x784xf32>
    %1 = arith.truncf %0 : vector<8x784xf32> to vector<8x784xbf16>
    %c0_1 = arith.constant 0 : index
    %c0_2 = arith.constant 0 : index
    %2 = vector.load %arg5[%c0_1, %c0_2] : memref<3x128xf32, #tpu.memory_space<vmem>>, vector<1x128xf32>
    %c1 = arith.constant 1 : index
    %c0_3 = arith.constant 0 : index
    %3 = vector.load %arg5[%c1, %c0_3] : memref<3x128xf32, #tpu.memory_space<vmem>>, vector<1x128xf32>
    %c2 = arith.constant 2 : index
    %c0_4 = arith.constant 0 : index
    %4 = vector.load %arg5[%c2, %c0_4] : memref<3x128xf32, #tpu.memory_space<vmem>>, vector<1x128xf32>
    %c0_5 = arith.constant 0 : index
    %c0_6 = arith.constant 0 : index
    %5 = vector.load %arg2[%c0_5, %c0_6] : memref<784x128xbf16, #tpu.memory_space<vmem>>, vector<784x128xbf16>
    %cst = arith.constant dense<0.000000e+00> : vector<8x128xf32>
    %6 = tpu.matmul %1, %5, %cst {dimension_numbers = #tpu.dot_dimension_numbers<[1], [0], [0], [1], [0, 0, 1, 1], [], []>} : vector<8x784xbf16>, vector<784x128xbf16>, vector<8x128xf32> -> vector<8x128xf32>
    %7 = vector.broadcast %2 : vector<1x128xf32> to vector<8x128xf32>
    %8 = arith.addf %6, %7 : vector<8x128xf32>
    %cst_7 = arith.constant 0.000000e+00 : f32
    %9 = vector.broadcast %cst_7 : f32 to vector<8x128xf32>
    %10 = arith.maximumf %8, %9 : vector<8x128xf32>
    %11 = arith.truncf %10 : vector<8x128xf32> to vector<8x128xbf16>
    %c0_8 = arith.constant 0 : index
    %c0_9 = arith.constant 0 : index
    %12 = vector.load %arg3[%c0_8, %c0_9] : memref<128x128xbf16, #tpu.memory_space<vmem>>, vector<128x128xbf16>
    %cst_10 = arith.constant dense<0.000000e+00> : vector<8x128xf32>
    %13 = tpu.matmul %11, %12, %cst_10 {dimension_numbers = #tpu.dot_dimension_numbers<[1], [0], [0], [1], [0, 0, 1, 1], [], []>} : vector<8x128xbf16>, vector<128x128xbf16>, vector<8x128xf32> -> vector<8x128xf32>
    %14 = vector.broadcast %3 : vector<1x128xf32> to vector<8x128xf32>
    %15 = arith.addf %13, %14 : vector<8x128xf32>
    %cst_11 = arith.constant 0.000000e+00 : f32
    %16 = vector.broadcast %cst_11 : f32 to vector<8x128xf32>
    %17 = arith.maximumf %15, %16 : vector<8x128xf32>
    %18 = arith.truncf %17 : vector<8x128xf32> to vector<8x128xbf16>
    %c0_12 = arith.constant 0 : index
    %c0_13 = arith.constant 0 : index
    %19 = vector.load %arg4[%c0_12, %c0_13] : memref<128x128xbf16, #tpu.memory_space<vmem>>, vector<128x128xbf16>
    %cst_14 = arith.constant dense<0.000000e+00> : vector<8x128xf32>
    %20 = tpu.matmul %18, %19, %cst_14 {dimension_numbers = #tpu.dot_dimension_numbers<[1], [0], [0], [1], [0, 0, 1, 1], [], []>} : vector<8x128xbf16>, vector<128x128xbf16>, vector<8x128xf32> -> vector<8x128xf32>
    %21 = vector.broadcast %4 : vector<1x128xf32> to vector<8x128xf32>
    %22 = arith.addf %20, %21 : vector<8x128xf32>
    %cst_15 = arith.constant dense<0xFF800000> : vector<8xf32>
    %23 = vector.multi_reduction <maximumf>, %22, %cst_15 [1] : vector<8x128xf32> to vector<8xf32>
    %24 = vector.shape_cast %23 : vector<8xf32> to vector<8x1xf32>
    %25 = vector.broadcast %24 : vector<8x1xf32> to vector<8x128xf32>
    %26 = arith.subf %22, %25 : vector<8x128xf32>
    %27 = math.exp %26 : vector<8x128xf32>
    %cst_16 = arith.constant dense<0.000000e+00> : vector<8xf32>
    %28 = vector.multi_reduction <add>, %27, %cst_16 [1] : vector<8x128xf32> to vector<8xf32>
    %29 = vector.shape_cast %28 : vector<8xf32> to vector<8x1xf32>
    %30 = tpu.reciprocal %29 {approx = true} : vector<8x1xf32> -> vector<8x1xf32>
    %31 = arith.mulf %29, %30 : vector<8x1xf32>
    %cst_17 = arith.constant 2.000000e+00 : f32
    %32 = vector.broadcast %cst_17 : f32 to vector<8x1xf32>
    %33 = arith.subf %32, %31 : vector<8x1xf32>
    %34 = arith.mulf %30, %33 : vector<8x1xf32>
    %35 = vector.broadcast %34 : vector<8x1xf32> to vector<8x128xf32>
    %36 = arith.mulf %27, %35 : vector<8x128xf32>
    %c0_18 = arith.constant 0 : index
    %c0_19 = arith.constant 0 : index
    %37 = vector.load %arg6[%c0_18, %c0_19] : memref<8x128xf32, #tpu.memory_space<vmem>>, vector<8x128xf32>
    tpu.vector_store %arg6[%c0_18, %c0_19], %36 {strides = array<i32>} : memref<8x128xf32, #tpu.memory_space<vmem>>, vector<8x128xf32>,
    return
  }
  func.func @transform_0(%arg0: i32) -> (i32, i32) {
    %c0_i32 = arith.constant 0 : i32
    %c0_i32_0 = arith.constant 0 : i32
    return %arg0, %c0_i32 : i32, i32
  }
  func.func @transform_1(%arg0: i32) -> (i32, i32) {
    %c0_i32 = arith.constant 0 : i32
    %c0_i32_0 = arith.constant 0 : i32
    %c0_i32_1 = arith.constant 0 : i32
    return %c0_i32, %c0_i32_0 : i32, i32
  }
  func.func @transform_2(%arg0: i32) -> (i32, i32) {
    %c0_i32 = arith.constant 0 : i32
    %c0_i32_0 = arith.constant 0 : i32
    %c0_i32_1 = arith.constant 0 : i32
    return %c0_i32, %c0_i32_0 : i32, i32
  }
  func.func @transform_3(%arg0: i32) -> (i32, i32) {
    %c0_i32 = arith.constant 0 : i32
    %c0_i32_0 = arith.constant 0 : i32
    %c0_i32_1 = arith.constant 0 : i32
    return %c0_i32, %c0_i32_0 : i32, i32
  }
  func.func @transform_4(%arg0: i32) -> (i32, i32) {
    %c0_i32 = arith.constant 0 : i32
    %c0_i32_0 = arith.constant 0 : i32
    %c0_i32_1 = arith.constant 0 : i32
    return %c0_i32, %c0_i32_0 : i32, i32
  }
  func.func @transform_5(%arg0: i32) -> (i32, i32) {
    %c0_i32 = arith.constant 0 : i32
    %c0_i32_0 = arith.constant 0 : i32
    return %arg0, %c0_i32 : i32, i32
  }
}

</mosaic_0001>

<llo_original>
// kernel: mnist_mlp.1
$region0: #{mnist_mlp.1}
  #allocation0 [shape = 'u32[]', space=smem, size = 0x4, offset = 0x4, fixed_abs, tag = 'smem constant byte address 0x4 - core index']
  #allocation1 [shape = 'u32[72,128]{1,0:T(1,128)}', space=vmem, size = 0x9000, scoped, tag = 'internal scratch']
  %s0 = inlined_call_operand.hbm [shape: f32[8,784], index: 0, kind: input, shape index: {}]
  %s1 = inlined_call_operand.hbm [shape: bf16[784,128], index: 1, kind: input, shape index: {}]
  %s2 = inlined_call_operand.hbm [shape: bf16[128,128], index: 2, kind: input, shape index: {}]
  %s3 = inlined_call_operand.hbm [shape: bf16[128,128], index: 3, kind: input, shape index: {}]
  %s4 = inlined_call_operand.hbm [shape: f32[3,128], index: 4, kind: input, shape index: {}]
  %s5 = inlined_call_operand.hbm [shape: f32[8,128], index: 5, kind: output, shape index: {}]
  %s6 = sld [smem:[#allocation0]]
  $region50: #{mnist_mlp.1} parent=0
    _
  %s8 = ssub.s32 1, %s6
  %s9 = scalar_select 0, %s8, %s6
  $region1: #{mnist_mlp.1} parent=0
    #allocation2 [shape = 'u8[28672]{0}', space=vmem, size = 0x7000, scoped, tag = 'input window, operand 0, single buffered']
    #allocation3 [shape = 's32[1]{0}', space=sflag, size = 0x4, scoped, tag = 'scoped memory for mnist_mlp.1']
    #allocation4 [shape = 's32[1]{0}', space=sflag, size = 0x4, scoped, tag = 'scoped memory for mnist_mlp.1']
    #allocation5 [shape = 'u8[200704]{0}', space=vmem, size = 0x31000, scoped, tag = 'input window, operand 1, single buffered']
    #allocation6 [shape = 's32[1]{0}', space=sflag, size = 0x4, scoped, tag = 'scoped memory for mnist_mlp.1']
    #allocation7 [shape = 'u8[32768]{0}', space=vmem, size = 0x8000, scoped, tag = 'input window, operand 2, single buffered']
    #allocation8 [shape = 'u8[32768]{0}', space=vmem, size = 0x8000, scoped, tag = 'input window, operand 3, single buffered']
    #allocation9 [shape = 's32[1]{0}', space=sflag, size = 0x4, scoped, tag = 'scoped memory for mnist_mlp.1']
    #allocation10 [shape = 'u8[2048]{0}', space=vmem, size = 0x800, scoped, tag = 'input window, operand 4, single buffered']
    #allocation11 [shape = 'u8[4096]{0}', space=vmem, size = 0x1000, scoped, tag = 'output window, operand 0, single buffered']
    %10 = vsyncpa [#allocation3], 0
    %11 = vsyncpa [#allocation6], 0
    %12 = vsyncpa [#allocation9], 0
    %13 = vsyncpa [#allocation4], 0
    // Predicated region
    $region2: #{mnist_mlp.1} parent=1 // pred_check
      _
    $region3: #{mnist_mlp.1} parent=1 // pred_check_branch
      %15 = sbr.rel (0) target = $region5
    $region4: #{mnist_mlp.1} parent=1 // pred_region
      %17 = vsyncadd [#allocation3], 0
      %s19 = sshll.u32 %s0, 4
      %s20 = int_to_ptr.hbm [resolvable:$true] %s19
      %s21 = sshll.u32 [#allocation2], 4
      %s22 = int_to_ptr.vmem [resolvable:$true] %s21
      %24 = dma.hbm_to_vmem [thread:$0]  %s20, 896, %s22, [#allocation3]
    $region5: #{mnist_mlp.1} parent=1 // pred_fallthru
      _
    // Predicated region
    $region6: #{mnist_mlp.1} parent=1 // pred_check
      _
    $region7: #{mnist_mlp.1} parent=1 // pred_check_branch
      %26 = sbr.rel (0) target = $region9
    $region8: #{mnist_mlp.1} parent=1 // pred_region
      %28 = vsyncadd [#allocation6], 0
      %s29 = sshll.u32 %s1, 4
      %s30 = int_to_ptr.hbm [resolvable:$true] %s29
      %s31 = sshll.u32 [#allocation5], 4
      %s32 = int_to_ptr.vmem [resolvable:$true] %s31
      %37 = dma.hbm_to_vmem [thread:$0]  %s30, 6272, %s32, [#allocation6], 64, 64, 4
    $region9: #{mnist_mlp.1} parent=1 // pred_fallthru
      _
    // Predicated region
    $region10: #{mnist_mlp.1} parent=1 // pred_check
      _
    $region11: #{mnist_mlp.1} parent=1 // pred_check_branch
      %39 = sbr.rel (0) target = $region13
    $region12: #{mnist_mlp.1} parent=1 // pred_region
      %41 = vsyncadd [#allocation6], 0
      %s42 = sshll.u32 %s2, 4
      %s43 = int_to_ptr.hbm [resolvable:$true] %s42
      %s44 = sshll.u32 [#allocation7], 4
      %s45 = int_to_ptr.vmem [resolvable:$true] %s44
      %50 = dma.hbm_to_vmem [thread:$0]  %s43, 1024, %s45, [#allocation6], 64, 64, 4
    $region13: #{mnist_mlp.1} parent=1 // pred_fallthru
      _
    // Predicated region
    $region14: #{mnist_mlp.1} parent=1 // pred_check
      _
    $region15: #{mnist_mlp.1} parent=1 // pred_check_branch
      %52 = sbr.rel (0) target = $region17
    $region16: #{mnist_mlp.1} parent=1 // pred_region
      %54 = vsyncadd [#allocation9], 0
      %s55 = sshll.u32 %s3, 4
      %s56 = int_to_ptr.hbm [resolvable:$true] %s55
      %s57 = sshll.u32 [#allocation8], 4
      %s58 = int_to_ptr.vmem [resolvable:$true] %s57
      %63 = dma.hbm_to_vmem [thread:$0]  %s56, 1024, %s58, [#allocation9], 64, 64, 4
    $region17: #{mnist_mlp.1} parent=1 // pred_fallthru
      _
    // Predicated region
    $region18: #{mnist_mlp.1} parent=1 // pred_check
      _
    $region19: #{mnist_mlp.1} parent=1 // pred_check_branch
      %65 = sbr.rel (0) target = $region21
    $region20: #{mnist_mlp.1} parent=1 // pred_region
      %67 = vsyncadd [#allocation9], 0
      %s69 = sshll.u32 %s4, 4
      %s70 = int_to_ptr.hbm [resolvable:$true] %s69
      %s71 = sshll.u32 [#allocation10], 4
      %s72 = int_to_ptr.vmem [resolvable:$true] %s71
      %74 = dma.hbm_to_vmem [thread:$0]  %s70, 64, %s72, [#allocation9]
    $region21: #{mnist_mlp.1} parent=1 // pred_fallthru
      _
    // Predicated region
    $region22: #{mnist_mlp.1} parent=1 // pred_check
      _
    $region23: #{mnist_mlp.1} parent=1 // pred_check_branch
      %76 = sbr.rel (0) target = $region25
    $region24: #{mnist_mlp.1} parent=1 // pred_region
      %78 = dma.done [#allocation3], 896
    $region25: #{mnist_mlp.1} parent=1 // pred_fallthru
      _
    // Predicated region
    $region26: #{mnist_mlp.1} parent=1 // pred_check
      _
    $region27: #{mnist_mlp.1} parent=1 // pred_check_branch
      %80 = sbr.rel (0) target = $region29
    $region28: #{mnist_mlp.1} parent=1 // pred_region
      %82 = dma.done [#allocation6], 6272
    $region29: #{mnist_mlp.1} parent=1 // pred_fallthru
      _
    // Predicated region
    $region30: #{mnist_mlp.1} parent=1 // pred_check
      _
    $region31: #{mnist_mlp.1} parent=1 // pred_check_branch
      %84 = sbr.rel (0) target = $region33
    $region32: #{mnist_mlp.1} parent=1 // pred_region
      %86 = dma.done [#allocation6], 1024
    $region33: #{mnist_mlp.1} parent=1 // pred_fallthru
      _
    // Predicated region
    $region34: #{mnist_mlp.1} parent=1 // pred_check
      _
    $region35: #{mnist_mlp.1} parent=1 // pred_check_branch
      %88 = sbr.rel (0) target = $region37
    $region36: #{mnist_mlp.1} parent=1 // pred_region
      %90 = dma.done [#allocation9], 1024
    $region37: #{mnist_mlp.1} parent=1 // pred_fallthru
      _
    // Predicated region
    $region38: #{mnist_mlp.1} parent=1 // pred_check
      _
    $region39: #{mnist_mlp.1} parent=1 // pred_check_branch
      %92 = sbr.rel (0) target = $region41
    $region40: #{mnist_mlp.1} parent=1 // pred_region
      %94 = dma.done [#allocation9], 64
    $region41: #{mnist_mlp.1} parent=1 // pred_fallthru
      _
    %v96 = vld [vmem:[#allocation2] sm:$0xff]
    %v97 = vld [vmem:[#allocation2 + $0x8] sm:$0xff]
    %v98 = vld [vmem:[#allocation2 + $0x10] sm:$0xff]
    %v99 = vld [vmem:[#allocation2 + $0x18] sm:$0xff]
    %v100 = vld [vmem:[#allocation2 + $0x20] sm:$0xff]
    %v101 = vld [vmem:[#allocation2 + $0x28] sm:$0xff]
    %v102 = vld [vmem:[#allocation2 + $0x30] sm:$0xff]
    %v103 = vpack.c.bf16 %v96, %v96
    %v104 = vpack.c.bf16 %v97, %v97
    %v105 = vpack.c.bf16 %v98, %v98
    %v106 = vpack.c.bf16 %v99, %v99
    %v107 = vpack.c.bf16 %v100, %v100
    %v108 = vpack.c.bf16 %v101, %v101
    %v109 = vpack.c.bf16 %v102, %v102
    %v110 = vld [vmem:[#allocation10] sm:$0x1]
    %v111 = vld [vmem:[#allocation10 + $0x1] sm:$0x1]
    %v112 = vld [vmem:[#allocation10 + $0x2] sm:$0x1]
    %v113 = vld [vmem:[#allocation5] sm:$0xf]
    %v114 = vld [vmem:[#allocation5 + $0x4] sm:$0xf]
    %v115 = vld [vmem:[#allocation5 + $0x8] sm:$0xf]
    %v116 = vld [vmem:[#allocation5 + $0xc] sm:$0xf]
    %v117 = vld [vmem:[#allocation5 + $0x10] sm:$0xf]
    %v118 = vld [vmem:[#allocation5 + $0x14] sm:$0xf]
    %v119 = vld [vmem:[#allocation5 + $0x18] sm:$0xf]
    %v120 = vld [vmem:[#allocation5 + $0x1c] sm:$0xf]
    %v121 = vld [vmem:[#allocation5 + $0x20] sm:$0xf]
    %v122 = vld [vmem:[#allocation5 + $0x24] sm:$0xf]
    %v123 = vld [vmem:[#allocation5 + $0x28] sm:$0xf]
    %v124 = vld [vmem:[#allocation5 + $0x2c] sm:$0xf]
    %v125 = vld [vmem:[#allocation5 + $0x30] sm:$0xf]
    %v126 = vld [vmem:[#allocation5 + $0x34] sm:$0xf]
    %v127 = vld [vmem:[#allocation5 + $0x38] sm:$0xf]
    %v128 = vld [vmem:[#allocation5 + $0x3c] sm:$0xf]
    %v129 = vld [vmem:[#allocation5 + $0x40] sm:$0xf]
    %v130 = vld [vmem:[#allocation5 + $0x44] sm:$0xf]
    %v131 = vld [vmem:[#allocation5 + $0x48] sm:$0xf]
    %v132 = vld [vmem:[#allocation5 + $0x4c] sm:$0xf]
    %v133 = vld [vmem:[#allocation5 + $0x50] sm:$0xf]
    %v134 = vld [vmem:[#allocation5 + $0x54] sm:$0xf]
    %v135 = vld [vmem:[#allocation5 + $0x58] sm:$0xf]
    %v136 = vld [vmem:[#allocation5 + $0x5c] sm:$0xf]
    %v137 = vld [vmem:[#allocation5 + $0x60] sm:$0xf]
    %v138 = vld [vmem:[#allocation5 + $0x64] sm:$0xf]
    %v139 = vld [vmem:[#allocation5 + $0x68] sm:$0xf]
    %v140 = vld [vmem:[#allocation5 + $0x6c] sm:$0xf]
    %v141 = vld [vmem:[#allocation5 + $0x70] sm:$0xf]
    %v142 = vld [vmem:[#allocation5 + $0x74] sm:$0xf]
    %v143 = vld [vmem:[#allocation5 + $0x78] sm:$0xf]
    %v144 = vld [vmem:[#allocation5 + $0x7c] sm:$0xf]
    %v145 = vld [vmem:[#allocation5 + $0x80] sm:$0xf]
    %v146 = vld [vmem:[#allocation5 + $0x84] sm:$0xf]
    %v147 = vld [vmem:[#allocation5 + $0x88] sm:$0xf]
    %v148 = vld [vmem:[#allocation5 + $0x8c] sm:$0xf]
    %v149 = vld [vmem:[#allocation5 + $0x90] sm:$0xf]
    %v150 = vld [vmem:[#allocation5 + $0x94] sm:$0xf]
    %v151 = vld [vmem:[#allocation5 + $0x98] sm:$0xf]
    %v152 = vld [vmem:[#allocation5 + $0x9c] sm:$0xf]
    %v153 = vld [vmem:[#allocation5 + $0xa0] sm:$0xf]
    %v154 = vld [vmem:[#allocation5 + $0xa4] sm:$0xf]
    %v155 = vld [vmem:[#allocation5 + $0xa8] sm:$0xf]
    %v156 = vld [vmem:[#allocation5 + $0xac] sm:$0xf]
    %v157 = vld [vmem:[#allocation5 + $0xb0] sm:$0xf]
    %v158 = vld [vmem:[#allocation5 + $0xb4] sm:$0xf]
    %v159 = vld [vmem:[#allocation5 + $0xb8] sm:$0xf]
    %v160 = vld [vmem:[#allocation5 + $0xbc] sm:$0xf]
    %v161 = vld [vmem:[#allocation5 + $0xc0] sm:$0xf]
    %v162 = vld [vmem:[#allocation5 + $0xc4] sm:$0xf]
    %v163 = vld [vmem:[#allocation5 + $0xc8] sm:$0xf]
    %v164 = vld [vmem:[#allocation5 + $0xcc] sm:$0xf]
    %v165 = vld [vmem:[#allocation5 + $0xd0] sm:$0xf]
    %v166 = vld [vmem:[#allocation5 + $0xd4] sm:$0xf]
    %v167 = vld [vmem:[#allocation5 + $0xd8] sm:$0xf]
    %v168 = vld [vmem:[#allocation5 + $0xdc] sm:$0xf]
    %v169 = vld [vmem:[#allocation5 + $0xe0] sm:$0xf]
    %v170 = vld [vmem:[#allocation5 + $0xe4] sm:$0xf]
    %v171 = vld [vmem:[#allocation5 + $0xe8] sm:$0xf]
    %v172 = vld [vmem:[#allocation5 + $0xec] sm:$0xf]
    %v173 = vld [vmem:[#allocation5 + $0xf0] sm:$0xf]
    %v174 = vld [vmem:[#allocation5 + $0xf4] sm:$0xf]
    %v175 = vld [vmem:[#allocation5 + $0xf8] sm:$0xf]
    %v176 = vld [vmem:[#allocation5 + $0xfc] sm:$0xf]
    %v177 = vld [vmem:[#allocation5 + $0x100] sm:$0xf]
    %v178 = vld [vmem:[#allocation5 + $0x104] sm:$0xf]
    %v179 = vld [vmem:[#allocation5 + $0x108] sm:$0xf]
    %v180 = vld [vmem:[#allocation5 + $0x10c] sm:$0xf]
    %v181 = vld [vmem:[#allocation5 + $0x110] sm:$0xf]
    %v182 = vld [vmem:[#allocation5 + $0x114] sm:$0xf]
    %v183 = vld [vmem:[#allocation5 + $0x118] sm:$0xf]
    %v184 = vld [vmem:[#allocation5 + $0x11c] sm:$0xf]
    %v185 = vld [vmem:[#allocation5 + $0x120] sm:$0xf]
    %v186 = vld [vmem:[#allocation5 + $0x124] sm:$0xf]
    %v187 = vld [vmem:[#allocation5 + $0x128] sm:$0xf]
    %v188 = vld [vmem:[#allocation5 + $0x12c] sm:$0xf]
    %v189 = vld [vmem:[#allocation5 + $0x130] sm:$0xf]
    %v190 = vld [vmem:[#allocation5 + $0x134] sm:$0xf]
    %v191 = vld [vmem:[#allocation5 + $0x138] sm:$0xf]
    %v192 = vld [vmem:[#allocation5 + $0x13c] sm:$0xf]
    %v193 = vld [vmem:[#allocation5 + $0x140] sm:$0xf]
    %v194 = vld [vmem:[#allocation5 + $0x144] sm:$0xf]
    %v195 = vld [vmem:[#allocation5 + $0x148] sm:$0xf]
    %v196 = vld [vmem:[#allocation5 + $0x14c] sm:$0xf]
    %v197 = vld [vmem:[#allocation5 + $0x150] sm:$0xf]
    %v198 = vld [vmem:[#allocation5 + $0x154] sm:$0xf]
    %v199 = vld [vmem:[#allocation5 + $0x158] sm:$0xf]
    %v200 = vld [vmem:[#allocation5 + $0x15c] sm:$0xf]
    %v201 = vld [vmem:[#allocation5 + $0x160] sm:$0xf]
    %v202 = vld [vmem:[#allocation5 + $0x164] sm:$0xf]
    %v203 = vld [vmem:[#allocation5 + $0x168] sm:$0xf]
    %v204 = vld [vmem:[#allocation5 + $0x16c] sm:$0xf]
    %v205 = vld [vmem:[#allocation5 + $0x170] sm:$0xf]
    %v206 = vld [vmem:[#allocation5 + $0x174] sm:$0xf]
    %v207 = vld [vmem:[#allocation5 + $0x178] sm:$0xf]
    %v208 = vld [vmem:[#allocation5 + $0x17c] sm:$0xf]
    %v209 = vld [vmem:[#allocation5 + $0x180] sm:$0xf]
    %v210 = vld [vmem:[#allocation5 + $0x184] sm:$0xf]
    %v211 = vperm.slane %v110, 0
    %v310 = vunpack.c.l.b16 %v113
    %v311 = vunpack.c.l.b16 %v114
    %v312 = vunpack.c.l.b16 %v115
    %v313 = vunpack.c.l.b16 %v116
    %v314 = vunpack.c.l.b16 %v117
    %v315 = vunpack.c.l.b16 %v118
    %v316 = vunpack.c.l.b16 %v119
    %v317 = vunpack.c.l.b16 %v120
    %v318 = vunpack.c.l.b16 %v121
    %v319 = vunpack.c.l.b16 %v122
    %v320 = vunpack.c.l.b16 %v123
    %v321 = vunpack.c.l.b16 %v124
    %v322 = vunpack.c.l.b16 %v125
    %v323 = vunpack.c.l.b16 %v126
    %v324 = vunpack.c.l.b16 %v127
    %v325 = vunpack.c.l.b16 %v128
    %v326 = vunpack.c.l.b16 %v129
    %v327 = vunpack.c.l.b16 %v130
    %v328 = vunpack.c.l.b16 %v131
    %v329 = vunpack.c.l.b16 %v132
    %v330 = vunpack.c.l.b16 %v133
    %v331 = vunpack.c.l.b16 %v134
    %v332 = vunpack.c.l.b16 %v135
    %v333 = vunpack.c.l.b16 %v136
    %v334 = vunpack.c.l.b16 %v137
    %v335 = vunpack.c.l.b16 %v138
    %v336 = vunpack.c.l.b16 %v139
    %v337 = vunpack.c.l.b16 %v140
    %v338 = vunpack.c.l.b16 %v141
    %v339 = vunpack.c.l.b16 %v142
    %v340 = vunpack.c.l.b16 %v143
    %v341 = vunpack.c.l.b16 %v144
    %v342 = vunpack.c.l.b16 %v145
    %v343 = vunpack.c.l.b16 %v146
    %v344 = vunpack.c.l.b16 %v147
    %v345 = vunpack.c.l.b16 %v148
    %v346 = vunpack.c.l.b16 %v149
    %v347 = vunpack.c.l.b16 %v150
    %v348 = vunpack.c.l.b16 %v151
    %v349 = vunpack.c.l.b16 %v152
    %v350 = vunpack.c.l.b16 %v153
    %v351 = vunpack.c.l.b16 %v154
    %v352 = vunpack.c.l.b16 %v155
    %v353 = vunpack.c.l.b16 %v156
    %v354 = vunpack.c.l.b16 %v157
    %v355 = vunpack.c.l.b16 %v158
    %v356 = vunpack.c.l.b16 %v159
    %v357 = vunpack.c.l.b16 %v160
    %v358 = vunpack.c.l.b16 %v161
    %v359 = vunpack.c.l.b16 %v162
    %v360 = vunpack.c.l.b16 %v163
    %v361 = vunpack.c.l.b16 %v164
    %v362 = vunpack.c.l.b16 %v165
    %v363 = vunpack.c.l.b16 %v166
    %v364 = vunpack.c.l.b16 %v167
    %v365 = vunpack.c.l.b16 %v168
    %v366 = vunpack.c.l.b16 %v169
    %v367 = vunpack.c.l.b16 %v170
    %v368 = vunpack.c.l.b16 %v171
    %v369 = vunpack.c.l.b16 %v172
    %v370 = vunpack.c.l.b16 %v173
    %v371 = vunpack.c.l.b16 %v174
    %v372 = vunpack.c.l.b16 %v175
    %v373 = vunpack.c.l.b16 %v176
    %v374 = vunpack.c.l.b16 %v177
    %v375 = vunpack.c.l.b16 %v178
    %v376 = vunpack.c.l.b16 %v179
    %v377 = vunpack.c.l.b16 %v180
    %v378 = vunpack.c.l.b16 %v181
    %v379 = vunpack.c.l.b16 %v182
    %v380 = vunpack.c.l.b16 %v183
    %v381 = vunpack.c.l.b16 %v184
    %v382 = vunpack.c.l.b16 %v185
    %v383 = vunpack.c.l.b16 %v186
    %v384 = vunpack.c.l.b16 %v187
    %v385 = vunpack.c.l.b16 %v188
    %v386 = vunpack.c.l.b16 %v189
    %v387 = vunpack.c.l.b16 %v190
    %v388 = vunpack.c.l.b16 %v191
    %v389 = vunpack.c.l.b16 %v192
    %v390 = vunpack.c.l.b16 %v193
    %v391 = vunpack.c.l.b16 %v194
    %v392 = vunpack.c.l.b16 %v195
    %v393 = vunpack.c.l.b16 %v196
    %v394 = vunpack.c.l.b16 %v197
    %v395 = vunpack.c.l.b16 %v198
    %v396 = vunpack.c.l.b16 %v199
    %v397 = vunpack.c.l.b16 %v200
    %v398 = vunpack.c.l.b16 %v201
    %v399 = vunpack.c.l.b16 %v202
    %v400 = vunpack.c.l.b16 %v203
    %v401 = vunpack.c.l.b16 %v204
    %v402 = vunpack.c.l.b16 %v205
    %v403 = vunpack.c.l.b16 %v206
    %v404 = vunpack.c.l.b16 %v207
    %v405 = vunpack.c.l.b16 %v208
    %v406 = vunpack.c.l.b16 %v209
    %v407 = vunpack.c.l.b16 %v210
    %v408 = vpack.c.b16 %v311, %v310
    %v409 = vpack.c.b16 %v313, %v312
    %v410 = vpack.c.b16 %v315, %v314
    %v411 = vpack.c.b16 %v317, %v316
    %v412 = vpack.c.b16 %v319, %v318
    %v413 = vpack.c.b16 %v321, %v320
    %v414 = vpack.c.b16 %v323, %v322
    %v415 = vpack.c.b16 %v325, %v324
    %v416 = vpack.c.b16 %v327, %v326
    %v417 = vpack.c.b16 %v329, %v328
    %v418 = vpack.c.b16 %v331, %v330
    %v419 = vpack.c.b16 %v333, %v332
    %v420 = vpack.c.b16 %v335, %v334
    %v421 = vpack.c.b16 %v337, %v336
    %v422 = vpack.c.b16 %v339, %v338
    %v423 = vpack.c.b16 %v341, %v340
    %v424 = vpack.c.b16 %v343, %v342
    %v425 = vpack.c.b16 %v345, %v344
    %v426 = vpack.c.b16 %v347, %v346
    %v427 = vpack.c.b16 %v349, %v348
    %v428 = vpack.c.b16 %v351, %v350
    %v429 = vpack.c.b16 %v353, %v352
    %v430 = vpack.c.b16 %v355, %v354
    %v431 = vpack.c.b16 %v357, %v356
    %v432 = vpack.c.b16 %v359, %v358
    %v433 = vpack.c.b16 %v361, %v360
    %v434 = vpack.c.b16 %v363, %v362
    %v435 = vpack.c.b16 %v365, %v364
    %v436 = vpack.c.b16 %v367, %v366
    %v437 = vpack.c.b16 %v369, %v368
    %v438 = vpack.c.b16 %v371, %v370
    %v439 = vpack.c.b16 %v373, %v372
    %v440 = vpack.c.b16 %v375, %v374
    %v441 = vpack.c.b16 %v377, %v376
    %v442 = vpack.c.b16 %v379, %v378
    %v443 = vpack.c.b16 %v381, %v380
    %v444 = vpack.c.b16 %v383, %v382
    %v445 = vpack.c.b16 %v385, %v384
    %v446 = vpack.c.b16 %v387, %v386
    %v447 = vpack.c.b16 %v389, %v388
    %v448 = vpack.c.b16 %v391, %v390
    %v449 = vpack.c.b16 %v393, %v392
    %v450 = vpack.c.b16 %v395, %v394
    %v451 = vpack.c.b16 %v397, %v396
    %v452 = vpack.c.b16 %v399, %v398
    %v453 = vpack.c.b16 %v401, %v400
    %v454 = vpack.c.b16 %v403, %v402
    %v455 = vpack.c.b16 %v405, %v404
    %v456 = vpack.c.b16 %v407, %v406
    %vm506 = vcmask 130048
    %v508 = vsel %vm506, %v109, 0
    %510 = vmatpush.bf16.msra.mxu0 %v415
    %511 = vmatpush.bf16.msra.mxu0 %v414
    %512 = vmatpush.bf16.msra.mxu0 %v413
    %513 = vmatpush.bf16.msra.mxu0 %v412
    %514 = vmatpush.bf16.msra.mxu0 %v411
    %515 = vmatpush.bf16.msra.mxu0 %v410
    %516 = vmatpush.bf16.msra.mxu0 %v409
    %517 = vmatpush.bf16.msra.mxu0 %v408
    %518 = vmatmul.bf16.gmra.mxu0 %v103
    %v519 = vpop.f32.mrf.mxu0
    %v520 = vadd.f32 %v211, %v519
    %v521 = vpop.f32.mrf.mxu0
    %522 = vdwg.mxu0
    %523 = vmatpush.bf16.msra.mxu0 %v423
    %524 = vmatpush.bf16.msra.mxu0 %v422
    %525 = vmatpush.bf16.msra.mxu0 %v421
    %526 = vmatpush.bf16.msra.mxu0 %v420
    %527 = vmatpush.bf16.msra.mxu0 %v419
    %528 = vmatpush.bf16.msra.mxu0 %v418
    %529 = vmatpush.bf16.msra.mxu0 %v417
    %530 = vmatpush.bf16.msra.mxu0 %v416
    %531 = vmatmul.bf16.gmra.mxu0 %v104
    %v532 = vpop.f32.mrf.mxu0
    %v533 = vadd.f32 %v520, %v532
    %v534 = vpop.f32.mrf.mxu0
    %535 = vdwg.mxu0
    %536 = vmatpush.bf16.msra.mxu0 %v431
    %537 = vmatpush.bf16.msra.mxu0 %v430
    %538 = vmatpush.bf16.msra.mxu0 %v429
    %539 = vmatpush.bf16.msra.mxu0 %v428
    %540 = vmatpush.bf16.msra.mxu0 %v427
    %541 = vmatpush.bf16.msra.mxu0 %v426
    %542 = vmatpush.bf16.msra.mxu0 %v425
    %543 = vmatpush.bf16.msra.mxu0 %v424
    %544 = vmatmul.bf16.gmra.mxu0 %v105
    %v545 = vpop.f32.mrf.mxu0
    %v546 = vadd.f32 %v533, %v545
    %v547 = vpop.f32.mrf.mxu0
    %548 = vdwg.mxu0
    %549 = vmatpush.bf16.msra.mxu0 %v439
    %550 = vmatpush.bf16.msra.mxu0 %v438
    %551 = vmatpush.bf16.msra.mxu0 %v437
    %552 = vmatpush.bf16.msra.mxu0 %v436
    %553 = vmatpush.bf16.msra.mxu0 %v435
    %554 = vmatpush.bf16.msra.mxu0 %v434
    %555 = vmatpush.bf16.msra.mxu0 %v433
    %556 = vmatpush.bf16.msra.mxu0 %v432
    %557 = vmatmul.bf16.gmra.mxu0 %v106
    %v558 = vpop.f32.mrf.mxu0
    %v559 = vadd.f32 %v546, %v558
    %v560 = vpop.f32.mrf.mxu0
    %561 = vdwg.mxu0
    %562 = vmatpush.bf16.msra.mxu0 %v447
    %563 = vmatpush.bf16.msra.mxu0 %v446
    %564 = vmatpush.bf16.msra.mxu0 %v445
    %565 = vmatpush.bf16.msra.mxu0 %v444
    %566 = vmatpush.bf16.msra.mxu0 %v443
    %567 = vmatpush.bf16.msra.mxu0 %v442
    %568 = vmatpush.bf16.msra.mxu0 %v441
    %569 = vmatpush.bf16.msra.mxu0 %v440
    %570 = vmatmul.bf16.gmra.mxu0 %v107
    %v571 = vpop.f32.mrf.mxu0
    %v572 = vadd.f32 %v559, %v571
    %v573 = vpop.f32.mrf.mxu0
    %574 = vdwg.mxu0
    %575 = vmatpush.bf16.msra.mxu0 %v455
    %576 = vmatpush.bf16.msra.mxu0 %v454
    %577 = vmatpush.bf16.msra.mxu0 %v453
    %578 = vmatpush.bf16.msra.mxu0 %v452
    %579 = vmatpush.bf16.msra.mxu0 %v451
    %580 = vmatpush.bf16.msra.mxu0 %v450
    %581 = vmatpush.bf16.msra.mxu0 %v449
    %582 = vmatpush.bf16.msra.mxu0 %v448
    %583 = vmatmul.bf16.gmra.mxu0 %v108
    %v584 = vpop.f32.mrf.mxu0
    %v585 = vadd.f32 %v572, %v584
    %v586 = vpop.f32.mrf.mxu0
    %587 = vdwg.mxu0
    %588 = vmatpush.bf16.msra.mxu0 0
    %589 = vmatpush.bf16.msra.mxu0 0
    %590 = vmatpush.bf16.msra.mxu0 0
    %591 = vmatpush.bf16.msra.mxu0 0
    %592 = vmatpush.bf16.msra.mxu0 0
    %593 = vmatpush.bf16.msra.mxu0 0
    %594 = vmatpush.bf16.msra.mxu0 0
    %595 = vmatpush.bf16.msra.mxu0 %v456
    %596 = vmatmul.bf16.gmra.mxu0 %v508
    %v597 = vpop.f32.mrf.mxu0
    %v598 = vadd.f32 %v585, %v597
    %v599 = vpop.f32.mrf.mxu0
    %600 = vdwg.mxu0
    %v601 = vmax.f32 %v598, 0.0
    %v602 = vpack.c.bf16 %v601, %v601
    %v603 = vld [vmem:[#allocation7] sm:$0xf]
    %v604 = vld [vmem:[#allocation7 + $0x4] sm:$0xf]
    %v605 = vld [vmem:[#allocation7 + $0x8] sm:$0xf]
    %v606 = vld [vmem:[#allocation7 + $0xc] sm:$0xf]
    %v607 = vld [vmem:[#allocation7 + $0x10] sm:$0xf]
    %v608 = vld [vmem:[#allocation7 + $0x14] sm:$0xf]
    %v609 = vld [vmem:[#allocation7 + $0x18] sm:$0xf]
    %v610 = vld [vmem:[#allocation7 + $0x1c] sm:$0xf]
    %v611 = vld [vmem:[#allocation7 + $0x20] sm:$0xf]
    %v612 = vld [vmem:[#allocation7 + $0x24] sm:$0xf]
    %v613 = vld [vmem:[#allocation7 + $0x28] sm:$0xf]
    %v614 = vld [vmem:[#allocation7 + $0x2c] sm:$0xf]
    %v615 = vld [vmem:[#allocation7 + $0x30] sm:$0xf]
    %v616 = vld [vmem:[#allocation7 + $0x34] sm:$0xf]
    %v617 = vld [vmem:[#allocation7 + $0x38] sm:$0xf]
    %v618 = vld [vmem:[#allocation7 + $0x3c] sm:$0xf]
    %v619 = vperm.slane %v111, 0
    %v636 = vunpack.c.l.b16 %v603
    %v637 = vunpack.c.l.b16 %v604
    %v638 = vunpack.c.l.b16 %v605
    %v639 = vunpack.c.l.b16 %v606
    %v640 = vunpack.c.l.b16 %v607
    %v641 = vunpack.c.l.b16 %v608
    %v642 = vunpack.c.l.b16 %v609
    %v643 = vunpack.c.l.b16 %v610
    %v644 = vunpack.c.l.b16 %v611
    %v645 = vunpack.c.l.b16 %v612
    %v646 = vunpack.c.l.b16 %v613
    %v647 = vunpack.c.l.b16 %v614
    %v648 = vunpack.c.l.b16 %v615
    %v649 = vunpack.c.l.b16 %v616
    %v650 = vunpack.c.l.b16 %v617
    %v651 = vunpack.c.l.b16 %v618
    %v652 = vpack.c.b16 %v637, %v636
    %v653 = vpack.c.b16 %v639, %v638
    %v654 = vpack.c.b16 %v641, %v640
    %v655 = vpack.c.b16 %v643, %v642
    %v656 = vpack.c.b16 %v645, %v644
    %v657 = vpack.c.b16 %v647, %v646
    %v658 = vpack.c.b16 %v649, %v648
    %v659 = vpack.c.b16 %v651, %v650
    %668 = vmatpush.bf16.msra.mxu0 %v659
    %669 = vmatpush.bf16.msra.mxu0 %v658
    %670 = vmatpush.bf16.msra.mxu0 %v657
    %671 = vmatpush.bf16.msra.mxu0 %v656
    %672 = vmatpush.bf16.msra.mxu0 %v655
    %673 = vmatpush.bf16.msra.mxu0 %v654
    %674 = vmatpush.bf16.msra.mxu0 %v653
    %675 = vmatpush.bf16.msra.mxu0 %v652
    %676 = vmatmul.bf16.gmra.mxu0 %v602
    %v677 = vpop.f32.mrf.mxu0
    %v678 = vadd.f32 %v619, %v677
    %v679 = vpop.f32.mrf.mxu0
    %680 = vdwg.mxu0
    %v681 = vmax.f32 %v678, 0.0
    %v682 = vpack.c.bf16 %v681, %v681
    %v683 = vld [vmem:[#allocation8] sm:$0xf]
    %v684 = vld [vmem:[#allocation8 + $0x4] sm:$0xf]
    %v685 = vld [vmem:[#allocation8 + $0x8] sm:$0xf]
    %v686 = vld [vmem:[#allocation8 + $0xc] sm:$0xf]
    %v687 = vld [vmem:[#allocation8 + $0x10] sm:$0xf]
    %v688 = vld [vmem:[#allocation8 + $0x14] sm:$0xf]
    %v689 = vld [vmem:[#allocation8 + $0x18] sm:$0xf]
    %v690 = vld [vmem:[#allocation8 + $0x1c] sm:$0xf]
    %v691 = vld [vmem:[#allocation8 + $0x20] sm:$0xf]
    %v692 = vld [vmem:[#allocation8 + $0x24] sm:$0xf]
    %v693 = vld [vmem:[#allocation8 + $0x28] sm:$0xf]
    %v694 = vld [vmem:[#allocation8 + $0x2c] sm:$0xf]
    %v695 = vld [vmem:[#allocation8 + $0x30] sm:$0xf]
    %v696 = vld [vmem:[#allocation8 + $0x34] sm:$0xf]
    %v697 = vld [vmem:[#allocation8 + $0x38] sm:$0xf]
    %v698 = vld [vmem:[#allocation8 + $0x3c] sm:$0xf]
    %v699 = vperm.slane %v112, 0
    %v716 = vunpack.c.l.b16 %v683
    %v717 = vunpack.c.l.b16 %v684
    %v718 = vunpack.c.l.b16 %v685
    %v719 = vunpack.c.l.b16 %v686
    %v720 = vunpack.c.l.b16 %v687
    %v721 = vunpack.c.l.b16 %v688
    %v722 = vunpack.c.l.b16 %v689
    %v723 = vunpack.c.l.b16 %v690
    %v724 = vunpack.c.l.b16 %v691
    %v725 = vunpack.c.l.b16 %v692
    %v726 = vunpack.c.l.b16 %v693
    %v727 = vunpack.c.l.b16 %v694
    %v728 = vunpack.c.l.b16 %v695
    %v729 = vunpack.c.l.b16 %v696
    %v730 = vunpack.c.l.b16 %v697
    %v731 = vunpack.c.l.b16 %v698
    %v732 = vpack.c.b16 %v717, %v716
    %v733 = vpack.c.b16 %v719, %v718
    %v734 = vpack.c.b16 %v721, %v720
    %v735 = vpack.c.b16 %v723, %v722
    %v736 = vpack.c.b16 %v725, %v724
    %v737 = vpack.c.b16 %v727, %v726
    %v738 = vpack.c.b16 %v729, %v728
    %v739 = vpack.c.b16 %v731, %v730
    %748 = vmatpush.bf16.msra.mxu0 %v739
    %749 = vmatpush.bf16.msra.mxu0 %v738
    %750 = vmatpush.bf16.msra.mxu0 %v737
    %751 = vmatpush.bf16.msra.mxu0 %v736
    %752 = vmatpush.bf16.msra.mxu0 %v735
    %753 = vmatpush.bf16.msra.mxu0 %v734
    %754 = vmatpush.bf16.msra.mxu0 %v733
    %755 = vmatpush.bf16.msra.mxu0 %v732
    %756 = vmatmul.bf16.gmra.mxu0 %v682
    %v757 = vpop.f32.mrf.mxu0
    %v758 = vadd.f32 %v699, %v757
    %v759 = vpop.f32.mrf.mxu0
    %760 = vdwg.mxu0
    %761 = vmax.xlane.f32.xlu0 %v758
    %v762 = vpop.xlane.xlu0 %761
    %v763 = vsub.f32 %v758, %v762
    %v764 = vmul.f32 %v763, 1.442695
    %v765 = vpow.pop %v764
    %766 = vadd.xlane.f32.xlu0 %v765
    %v767 = vpop.xlane.xlu0 %766
    %v768 = vrcp.pop %v767
    %v769 = vmul.f32 %v767, %v768
    %v770 = vsub.f32 2.0, %v769
    %v771 = vmul.f32 %v768, %v770
    %v772 = vmul.f32 %v765, %v771
    %773 = vst [vmem:[#allocation11] sm:$0xff] %v772
    // Predicated region
    $region42: #{mnist_mlp.1} parent=1 // pred_check
      _
    $region43: #{mnist_mlp.1} parent=1 // pred_check_branch
      %775 = sbr.rel (0) target = $region45
    $region44: #{mnist_mlp.1} parent=1 // pred_region
      %777 = vsyncadd [#allocation4], 0
      %s779 = sshll.u32 [#allocation11], 4
      %s780 = int_to_ptr.vmem [resolvable:$true] %s779
      %s781 = sshll.u32 %s5, 4
      %s782 = int_to_ptr.hbm [resolvable:$true] %s781
      %784 = dma.vmem_to_hbm [thread:$0]  %s780, 128, %s782, [#allocation4]
    $region45: #{mnist_mlp.1} parent=1 // pred_fallthru
      _
    // Predicated region
    $region46: #{mnist_mlp.1} parent=1 // pred_check
      _
    $region47: #{mnist_mlp.1} parent=1 // pred_check_branch
      %786 = sbr.rel (0) target = $region49
    $region48: #{mnist_mlp.1} parent=1 // pred_region
      %788 = dma.done [#allocation4], 128
    $region49: #{mnist_mlp.1} parent=1 // pred_fallthru
      _
    %789 = vsyncpa [#allocation3], 1
    %790 = vsyncpa [#allocation6], 1
    %791 = vsyncpa [#allocation9], 1
    %792 = vsyncpa [#allocation4], 1

</llo_original>
